<compile_context>
chip_gen: v7x
topology: tpu7x:2x2x1
jax: 0.10.0
libtpu: 0.0.40
codegen_flags: <defaults>
</compile_context>

<pallas_src>
import functools
import math

import jax
import jax.numpy as jnp
from jax.experimental import pallas as pl
from jax.experimental.pallas import tpu as pltpu

_LANE = 128
_SUBLANE = 8
_MiB = 1024 * 1024


def _round_up(x, m):
    return (x + m - 1) // m * m


def _gelu(h, approx):
    if approx:
        # tanh approximation: transcendental goes to the (otherwise idle) EUP slot.
        c = 0.7978845608028654  # sqrt(2/pi)
        return 0.5 * h * (1.0 + jnp.tanh(c * (h + 0.044715 * h * h * h)))
    # exact erf GELU — matches torch.nn.functional.gelu default.
    return 0.5 * h * (1.0 + jax.lax.erf(h * 0.7071067811865476))


def _ffn_resident_kernel(x_ref, w1_ref, b1_ref, w2_ref, b2_ref, o_ref, acc_ref,
                         *, tile_ff, n_ff_blocks, approx_gelu, mxu_dtype):
    """W1/W2 fully VMEM-resident; d_ff reduction is an in-kernel loop."""
    # x_ref : [tm, dmp]   w1_ref: [dmp, dffp]   b1_ref: [1, dffp]
    # w2_ref: [dffp, dmp] b2_ref: [1, dmp]      o_ref : [tm, dmp]
    acc_ref[...] = jnp.zeros_like(acc_ref)

    x = x_ref[...]
    if x.dtype != mxu_dtype:
        x = x.astype(mxu_dtype)          # staged once per row tile

    @pl.loop(0, n_ff_blocks)
    def _(j):
        off = pl.multiple_of(j * tile_ff, _LANE)
        h = jnp.dot(x, w1_ref[:, pl.ds(off, tile_ff)],
                    preferred_element_type=jnp.float32)
        h = h + b1_ref[:, pl.ds(off, tile_ff)]
        h = _gelu(h, approx_gelu)
        # dropout: identity in eval/inference mode.
        acc_ref[...] += jnp.dot(h.astype(mxu_dtype),
                                w2_ref[pl.ds(off, tile_ff), :],
                                preferred_element_type=jnp.float32)

    o_ref[...] = (acc_ref[...] + b2_ref[...]).astype(o_ref.dtype)


def _ffn_stream_kernel(x_ref, w1_ref, b1_ref, w2_ref, b2_ref, o_ref, acc_ref,
                       *, approx_gelu, mxu_dtype):
    """Streaming fallback: grid axis j walks d_ff blocks; f32 accumulator scratch."""
    # x_ref : [tm, dmp]   w1_ref: [dmp, tff]   b1_ref: [1, tff]
    # w2_ref: [tff, dmp]  b2_ref: [1, dmp]     o_ref : [tm, dmp]
    j = pl.program_id(1)

    @pl.when(j == 0)
    def _():
        acc_ref[...] = jnp.zeros_like(acc_ref)

    h = jnp.dot(x_ref[...], w1_ref[...], preferred_element_type=jnp.float32)
    h = h + b1_ref[...]
    h = _gelu(h, approx_gelu)
    # dropout: identity in eval/inference mode.
    acc_ref[...] += jnp.dot(h.astype(mxu_dtype), w2_ref[...],
                            preferred_element_type=jnp.float32)

    @pl.when(j == pl.num_programs(1) - 1)
    def _():
        o_ref[...] = (acc_ref[...] + b2_ref[...]).astype(o_ref.dtype)


def _vmem_physical_bytes():
    try:
        info = pltpu.get_tpu_info()
        cap = getattr(info, "vmem_capacity_bytes", None)
        if cap:
            return int(cap)
    except Exception:
        pass
    try:
        kind = jax.devices()[0].device_kind.lower()
        if "v7" in kind or "7x" in kind:
            return 64 * _MiB
    except Exception:
        pass
    return 128 * _MiB


def feed_forward_network(x, w1, b1, w2, b2, *, tile_m=None, tile_ff=None,
                         use_bf16_matmul=False, approx_gelu=False,
                         resident_weights=None):
    """
    x  : [B, S, d_model] float32
    w1 : [d_model, d_ff]   (transpose of PyTorch linear1.weight)
    b1 : [d_ff]
    w2 : [d_ff, d_model]   (transpose of PyTorch linear2.weight)
    b2 : [d_model]
    returns [B, S, d_model]
    """
    B, S, d_model = x.shape
    d_ff = w1.shape[1]
    M = B * S

    out_dtype = x.dtype
    mxu_dtype = jnp.bfloat16 if use_bf16_matmul else jnp.float32
    w_item = jnp.dtype(mxu_dtype).itemsize
    x_item = w_item if use_bf16_matmul else jnp.dtype(x.dtype).itemsize
    out_item = jnp.dtype(out_dtype).itemsize

    # ---- lane-dense feature padding targets (zero padding is semantically inert).
    d_model_p = _round_up(d_model, _LANE)
    d_ff_align = _round_up(d_ff, _LANE)

    # ---- per-generation VMEM budget (headroom below physical VMEM).
    vmem_phys = _vmem_physical_bytes()
    vmem_budget = 48 * _MiB if vmem_phys <= 64 * _MiB else 96 * _MiB

    # ---- d_ff block size.
    if tile_ff is None:
        tile_ff = min(512, d_ff_align)
        # keep double-buffered W1/W2 blocks within half the budget (large d_model on v7x)
        while tile_ff > _LANE and 4 * d_model_p * tile_ff * w_item > vmem_budget // 2:
            tile_ff //= 2
    tile_ff = _round_up(max(int(tile_ff), _LANE), _LANE)
    tile_ff = min(tile_ff, d_ff_align)
    d_ff_p = _round_up(d_ff_align, tile_ff)      # reduction axis divides evenly
    n_ff_blocks = d_ff_p // tile_ff

    # ---- can both weight matrices stay VMEM-resident for the whole kernel?
    weight_bytes = 2 * d_model_p * d_ff_p * w_item + (d_ff_p + d_model_p) * 4
    if resident_weights is None:
        resident_weights = weight_bytes <= vmem_budget // 3

    # ---- row tile derived from the VMEM budget (not from a fixed global cap).
    if resident_weights:
        fixed = 2 * weight_bytes                         # weights (+buffer slack)
    else:
        fixed = (4 * d_model_p * tile_ff * w_item        # W1 + W2 blocks, dbl-buffered
                 + 4 * (d_ff_p + d_model_p) * 4)         # biases
    per_row = (2 * d_model_p * x_item        # x tile (double-buffered)
               + 2 * d_model_p * out_item    # out tile (double-buffered)
               + d_model_p * 4               # f32 accumulator scratch
               + 2 * tile_ff * 4)            # gelu intermediates

    auto_tile_m = tile_m is None
    if auto_tile_m:
        cap = 1024 if vmem_budget >= 96 * _MiB else 512
        avail = max(vmem_budget - fixed, per_row * _SUBLANE)
        tile_m = max(_SUBLANE, min(cap, avail // per_row))
    tile_m = _round_up(max(int(tile_m), _SUBLANE), _SUBLANE)
    tile_m = min(tile_m, _round_up(M, _SUBLANE))
    if auto_tile_m and M >= 2 * _SUBLANE:
        # keep >= 2 row tiles so the "parallel" axis can feed both v7x TensorCores
        tile_m = min(tile_m, _round_up(-(-M // 2), _SUBLANE))

    M_p = _round_up(M, tile_m)

    # ---- wrapper-side bf16 cast (halves streamed weight bytes & VMEM footprint);
    #      pad only when dims are not already aligned (no gratuitous HBM copies).
    x2d = x.reshape(M, d_model)
    if use_bf16_matmul:
        x2d = x2d.astype(jnp.bfloat16)
        w1c = w1.astype(jnp.bfloat16)
        w2c = w2.astype(jnp.bfloat16)
    else:
        w1c, w2c = w1, w2
    if (M_p, d_model_p) != (M, d_model):
        x2d = jnp.pad(x2d, ((0, M_p - M), (0, d_model_p - d_model)))
    if (d_model_p, d_ff_p) != (d_model, d_ff):
        w1c = jnp.pad(w1c, ((0, d_model_p - d_model), (0, d_ff_p - d_ff)))
        w2c = jnp.pad(w2c, ((0, d_ff_p - d_ff), (0, d_model_p - d_model)))
    b1_p = b1 if d_ff_p == d_ff else jnp.pad(b1, (0, d_ff_p - d_ff))
    b1_p = b1_p.reshape(1, d_ff_p).astype(jnp.float32)
    b2_p = b2 if d_model_p == d_model else jnp.pad(b2, (0, d_model_p - d_model))
    b2_p = b2_p.reshape(1, d_model_p).astype(jnp.float32)

    # ---- VMEM limit follows the actual working set, capped below physical VMEM.
    est = fixed + tile_m * per_row
    vmem_limit = int(min(max(est + 8 * _MiB, 32 * _MiB), vmem_phys - 8 * _MiB))

    cost = pl.CostEstimate(
        flops=int(4 * M_p * d_model_p * d_ff_p),
        transcendentals=int(M_p * d_ff_p),
        bytes_accessed=int(x2d.size * x2d.dtype.itemsize
                           + w1c.size * w1c.dtype.itemsize
                           + w2c.size * w2c.dtype.itemsize
                           + b1_p.size * 4 + b2_p.size * 4
                           + M_p * d_model_p * out_item),
    )

    if resident_weights:
        grid = (M_p // tile_m,)
        kernel = functools.partial(
            _ffn_resident_kernel, tile_ff=tile_ff, n_ff_blocks=n_ff_blocks,
            approx_gelu=approx_gelu, mxu_dtype=mxu_dtype)
        in_specs = [
            pl.BlockSpec((tile_m, d_model_p), lambda i: (i, 0)),     # X row tile
            pl.BlockSpec((d_model_p, d_ff_p), lambda i: (0, 0)),     # W1 (fetched once)
            pl.BlockSpec((1, d_ff_p), lambda i: (0, 0)),             # b1
            pl.BlockSpec((d_ff_p, d_model_p), lambda i: (0, 0)),     # W2 (fetched once)
            pl.BlockSpec((1, d_model_p), lambda i: (0, 0)),          # b2
        ]
        out_specs = pl.BlockSpec((tile_m, d_model_p), lambda i: (i, 0))
        dims = ("parallel",)
    else:
        grid = (M_p // tile_m, n_ff_blocks)
        kernel = functools.partial(
            _ffn_stream_kernel, approx_gelu=approx_gelu, mxu_dtype=mxu_dtype)
        in_specs = [
            pl.BlockSpec((tile_m, d_model_p), lambda i, j: (i, 0)),  # X row tile
            pl.BlockSpec((d_model_p, tile_ff), lambda i, j: (0, j)), # W1[:, j]
            pl.BlockSpec((1, tile_ff), lambda i, j: (0, j)),         # b1[j]
            pl.BlockSpec((tile_ff, d_model_p), lambda i, j: (j, 0)), # W2[j, :]
            pl.BlockSpec((1, d_model_p), lambda i, j: (0, 0)),       # b2
        ]
        out_specs = pl.BlockSpec((tile_m, d_model_p), lambda i, j: (i, 0))
        dims = ("parallel", "arbitrary")

    out = pl.pallas_call(
        kernel,
        out_shape=jax.ShapeDtypeStruct((M_p, d_model_p), out_dtype),
        grid_spec=pltpu.PrefetchScalarGridSpec(
            num_scalar_prefetch=0,
            grid=grid,
            in_specs=in_specs,
            out_specs=out_specs,
            scratch_shapes=[pltpu.VMEM((tile_m, d_model_p), jnp.float32)],
        ),
        compiler_params=pltpu.CompilerParams(
            dimension_semantics=dims,
            vmem_limit_bytes=vmem_limit,
        ),
        cost_estimate=cost,
    )(x2d, w1c, b1_p, w2c, b2_p)

    return out[:M, :d_model].reshape(B, S, d_model)


if __name__ == "__main__":
    def ref_ffn(x, w1, b1, w2, b2):
        h = x @ w1 + b1
        h = 0.5 * h * (1.0 + jax.lax.erf(h / jnp.sqrt(2.0)))
        return h @ w2 + b2

    # Small shapes consistent with the module: batch=2, seq=8, d_model=32, d_ff=64
    B, S, d_model, d_ff = 2, 8, 32, 64

    key = jax.random.PRNGKey(0)
    kx, kw1, kb1, kw2, kb2 = jax.random.split(key, 5)

    x = jax.random.normal(kx, (B, S, d_model), dtype=jnp.float32)

    # Deterministic parameters (PyTorch-Linear-style uniform bounds),
    # stored directly in the transposed-for-matmul layout.
    bound1 = 1.0 / math.sqrt(d_model)
    bound2 = 1.0 / math.sqrt(d_ff)
    w1 = jax.random.uniform(kw1, (d_model, d_ff), jnp.float32, -bound1, bound1)
    b1 = jax.random.uniform(kb1, (d_ff,), jnp.float32, -bound1, bound1)
    w2 = jax.random.uniform(kw2, (d_ff, d_model), jnp.float32, -bound2, bound2)
    b2 = jax.random.uniform(kb2, (d_model,), jnp.float32, -bound2, bound2)

    y_ref = ref_ffn(x, w1, b1, w2, b2)

    # 1) default config: VMEM-resident weights, exact erf GELU, f32 — tight match.
    y = jax.block_until_ready(feed_forward_network(x, w1, b1, w2, b2))
    assert jnp.allclose(y, y_ref, atol=1e-5, rtol=1e-5), "f32 mismatch vs reference"

    # 2) resident path with 2 row tiles and 3 in-kernel d_ff blocks
    #    (non-128-multiple d_ff exercises the zero padding), still exact f32.
    d_ff2 = 300
    w1b = jax.random.uniform(kw1, (d_model, d_ff2), jnp.float32, -bound1, bound1)
    b1b = jax.random.uniform(kb1, (d_ff2,), jnp.float32, -bound1, bound1)
    w2b = jax.random.uniform(kw2, (d_ff2, d_model), jnp.float32, -bound2, bound2)
    y2_ref = ref_ffn(x, w1b, b1b, w2b, b2)
    y2 = jax.block_until_ready(
        feed_forward_network(x, w1b, b1b, w2b, b2, tile_m=8, tile_ff=128))
    assert jnp.allclose(y2, y2_ref, atol=1e-5, rtol=1e-5), "resident-tiled f32 mismatch"

    # 3) streaming fallback path (weights forced out of VMEM residency), exact f32.
    y3 = jax.block_until_ready(
        feed_forward_network(x, w1b, b1b, w2b, b2, tile_m=8, tile_ff=128,
                             resident_weights=False))
    assert jnp.allclose(y3, y2_ref, atol=1e-5, rtol=1e-5), "streaming f32 mismatch"

    # 4) bf16 MXU perf path (f32 accumulation) + tanh GELU — loose tolerance.
    y4 = jax.block_until_ready(
        feed_forward_network(x, w1, b1, w2, b2,
                             use_bf16_matmul=True, approx_gelu=True))
    assert jnp.allclose(y4, y_ref, atol=5e-2, rtol=5e-2), "bf16 perf-path mismatch"

    print("KERNEL_OK")
</pallas_src>

<mosaic_0001>
module attributes {stable_mosaic.version = 11 : i64} {
  func.func @_ffn_resident_kernel(%arg0: i32, %arg1: memref<8x128xf32, #tpu.memory_space<vmem>>, %arg2: memref<128x128xf32, #tpu.memory_space<vmem>>, %arg3: memref<1x128xf32, #tpu.memory_space<vmem>>, %arg4: memref<128x128xf32, #tpu.memory_space<vmem>>, %arg5: memref<1x128xf32, #tpu.memory_space<vmem>>, %arg6: memref<8x128xf32, #tpu.memory_space<vmem>>, %arg7: memref<8x128xf32, #tpu.memory_space<vmem>>) attributes {dimension_semantics = [#tpu.dimension_semantics<parallel>], iteration_bounds = array<i64: 2>, scalar_prefetch = 0 : i64, scratch_operands = 1 : i64, tpu.core_type = #tpu.core_type<tc>, window_params = [{transform_indices = @transform_0, window_bounds = array<i64: 8, 128>}, {pipeline_mode = #tpu.pipeline_mode<synchronous>, transform_indices = @transform_1, window_bounds = array<i64: 128, 128>}, {pipeline_mode = #tpu.pipeline_mode<synchronous>, transform_indices = @transform_2, window_bounds = array<i64: 1, 128>}, {pipeline_mode = #tpu.pipeline_mode<synchronous>, transform_indices = @transform_3, window_bounds = array<i64: 128, 128>}, {pipeline_mode = #tpu.pipeline_mode<synchronous>, transform_indices = @transform_4, window_bounds = array<i64: 1, 128>}, {transform_indices = @transform_5, window_bounds = array<i64: 8, 128>}]} {
    %cst = arith.constant 0.000000e+00 : f32
    %0 = vector.broadcast %cst : f32 to vector<8x128xf32>
    %c0 = arith.constant 0 : index
    %c0_0 = arith.constant 0 : index
    %1 = vector.load %arg7[%c0, %c0_0] : memref<8x128xf32, #tpu.memory_space<vmem>>, vector<8x128xf32>
    tpu.vector_store %arg7[%c0, %c0_0], %0 {strides = array<i32>} : memref<8x128xf32, #tpu.memory_space<vmem>>, vector<8x128xf32>,
    %c0_1 = arith.constant 0 : index
    %c0_2 = arith.constant 0 : index
    %2 = vector.load %arg1[%c0_1, %c0_2] : memref<8x128xf32, #tpu.memory_space<vmem>>, vector<8x128xf32>
    %c0_i32 = arith.constant 0 : i32
    %c1_i32 = arith.constant 1 : i32
    %3 = arith.muli %c0_i32, %c1_i32 : i32
    %c0_i32_3 = arith.constant 0 : i32
    %4 = arith.addi %c0_i32_3, %3 : i32
    %c128_i32 = arith.constant 128 : i32
    %5 = arith.muli %4, %c128_i32 : i32
    %6 = tpu.assume_multiple %5, 128 : i32
    %c0_4 = arith.constant 0 : index
    %7 = arith.index_cast %6 : i32 to index
    %8 = vector.load %arg2[%c0_4, %7] : memref<128x128xf32, #tpu.memory_space<vmem>>, vector<128x128xf32>
    %cst_5 = arith.constant dense<0.000000e+00> : vector<8x128xf32>
    %9 = tpu.matmul %2, %8, %cst_5 {dimension_numbers = #tpu.dot_dimension_numbers<[1], [0], [0], [1], [0, 0, 1, 1], [], []>} : vector<8x128xf32>, vector<128x128xf32>, vector<8x128xf32> -> vector<8x128xf32>
    %c0_6 = arith.constant 0 : index
    %10 = arith.index_cast %6 : i32 to index
    %11 = vector.load %arg3[%c0_6, %10] : memref<1x128xf32, #tpu.memory_space<vmem>>, vector<1x128xf32>
    %12 = vector.broadcast %11 : vector<1x128xf32> to vector<8x128xf32>
    %13 = arith.addf %9, %12 : vector<8x128xf32>
    %cst_7 = arith.constant 5.000000e-01 : f32
    %14 = vector.broadcast %cst_7 : f32 to vector<8x128xf32>
    %15 = arith.mulf %14, %13 : vector<8x128xf32>
    %cst_8 = arith.constant 0.707106769 : f32
    %16 = vector.broadcast %cst_8 : f32 to vector<8x128xf32>
    %17 = arith.mulf %13, %16 : vector<8x128xf32>
    %18 = math.erf %17 : vector<8x128xf32>
    %cst_9 = arith.constant 1.000000e+00 : f32
    %19 = vector.broadcast %cst_9 : f32 to vector<8x128xf32>
    %20 = arith.addf %19, %18 : vector<8x128xf32>
    %21 = arith.mulf %15, %20 : vector<8x128xf32>
    %c0_10 = arith.constant 0 : index
    %c0_11 = arith.constant 0 : index
    %22 = vector.load %arg7[%c0_10, %c0_11] : memref<8x128xf32, #tpu.memory_space<vmem>>, vector<8x128xf32>
    %23 = arith.index_cast %6 : i32 to index
    %c0_12 = arith.constant 0 : index
    %24 = vector.load %arg4[%23, %c0_12] : memref<128x128xf32, #tpu.memory_space<vmem>>, vector<128x128xf32>
    %cst_13 = arith.constant dense<0.000000e+00> : vector<8x128xf32>
    %25 = tpu.matmul %21, %24, %cst_13 {dimension_numbers = #tpu.dot_dimension_numbers<[1], [0], [0], [1], [0, 0, 1, 1], [], []>} : vector<8x128xf32>, vector<128x128xf32>, vector<8x128xf32> -> vector<8x128xf32>
    %26 = arith.addf %22, %25 : vector<8x128xf32>
    %c0_14 = arith.constant 0 : index
    %c0_15 = arith.constant 0 : index
    %27 = vector.load %arg7[%c0_14, %c0_15] : memref<8x128xf32, #tpu.memory_space<vmem>>, vector<8x128xf32>
    tpu.vector_store %arg7[%c0_14, %c0_15], %26 {strides = array<i32>} : memref<8x128xf32, #tpu.memory_space<vmem>>, vector<8x128xf32>,
    %c1_i32_16 = arith.constant 1 : i32
    %c0_17 = arith.constant 0 : index
    %c0_18 = arith.constant 0 : index
    %28 = vector.load %arg7[%c0_17, %c0_18] : memref<8x128xf32, #tpu.memory_space<vmem>>, vector<8x128xf32>
    %c0_19 = arith.constant 0 : index
    %c0_20 = arith.constant 0 : index
    %29 = vector.load %arg5[%c0_19, %c0_20] : memref<1x128xf32, #tpu.memory_space<vmem>>, vector<1x128xf32>
    %30 = vector.broadcast %29 : vector<1x128xf32> to vector<8x128xf32>
    %31 = arith.addf %28, %30 : vector<8x128xf32>
    %c0_21 = arith.constant 0 : index
    %c0_22 = arith.constant 0 : index
    %32 = vector.load %arg6[%c0_21, %c0_22] : memref<8x128xf32, #tpu.memory_space<vmem>>, vector<8x128xf32>
    tpu.vector_store %arg6[%c0_21, %c0_22], %31 {strides = array<i32>} : memref<8x128xf32, #tpu.memory_space<vmem>>, vector<8x128xf32>,
    return
  }
  func.func @transform_0(%arg0: i32) -> (i32, i32) {
    %c0_i32 = arith.constant 0 : i32
    %c0_i32_0 = arith.constant 0 : i32
    return %arg0, %c0_i32 : i32, i32
  }
  func.func @transform_1(%arg0: i32) -> (i32, i32) {
    %c0_i32 = arith.constant 0 : i32
    %c0_i32_0 = arith.constant 0 : i32
    %c0_i32_1 = arith.constant 0 : i32
    return %c0_i32, %c0_i32_0 : i32, i32
  }
  func.func @transform_2(%arg0: i32) -> (i32, i32) {
    %c0_i32 = arith.constant 0 : i32
    %c0_i32_0 = arith.constant 0 : i32
    %c0_i32_1 = arith.constant 0 : i32
    return %c0_i32, %c0_i32_0 : i32, i32
  }
  func.func @transform_3(%arg0: i32) -> (i32, i32) {
    %c0_i32 = arith.constant 0 : i32
    %c0_i32_0 = arith.constant 0 : i32
    %c0_i32_1 = arith.constant 0 : i32
    return %c0_i32, %c0_i32_0 : i32, i32
  }
  func.func @transform_4(%arg0: i32) -> (i32, i32) {
    %c0_i32 = arith.constant 0 : i32
    %c0_i32_0 = arith.constant 0 : i32
    %c0_i32_1 = arith.constant 0 : i32
    return %c0_i32, %c0_i32_0 : i32, i32
  }
  func.func @transform_5(%arg0: i32) -> (i32, i32) {
    %c0_i32 = arith.constant 0 : i32
    %c0_i32_0 = arith.constant 0 : i32
    return %arg0, %c0_i32 : i32, i32
  }
}

</mosaic_0001>

<llo_original>
// kernel: tpu_custom_call.1
$region0: #{tpu_custom_call.1}
  #allocation0 [shape = 'u32[]', space=smem, size = 0x4, offset = 0x4, fixed_abs, tag = 'smem constant byte address 0x4 - core index']
  #allocation1 [shape = 'u32[144,128]{1,0:T(1,128)}', space=vmem, size = 0x12000, scoped, tag = 'internal scratch']
  #allocation2 [shape = 'f32[8,128]{1,0:T(8,128)}', space=vmem, size = 0x1000, scoped, tag = 'scratch operand']
  %s0 = inlined_call_operand.hbm [shape: f32[16,128], index: 0, kind: input, shape index: {}]
  %s1 = inlined_call_operand.hbm [shape: f32[128,128], index: 1, kind: input, shape index: {}]
  %s2 = inlined_call_operand.vmem [shape: f32[1,128], index: 2, kind: input, shape index: {}]
  %s3 = inlined_call_operand.hbm [shape: f32[128,128], index: 3, kind: input, shape index: {}]
  %s4 = inlined_call_operand.vmem [shape: f32[1,128], index: 4, kind: input, shape index: {}]
  %s5 = inlined_call_operand.hbm [shape: f32[16,128], index: 5, kind: output, shape index: {}]
  %s6 = sld [smem:[#allocation0]]
  $region65: #{tpu_custom_call.1} parent=0
    _
  %s8 = ssub.s32 1, %s6
  %s9 = scalar_select 0, %s8, %s6
  $region1: #{tpu_custom_call.1} parent=0
    #allocation3 [shape = 'u8[8192]{0}', space=vmem, size = 0x2000, scoped, tag = 'input window, operand 0']
    #allocation4 [shape = 's32[2]{0}', space=sflag, size = 0x8, scoped, tag = 'scoped memory for tpu_custom_call.1']
    #allocation5 [shape = 's32[2]{0}', space=sflag, size = 0x8, scoped, tag = 'scoped memory for tpu_custom_call.1']
    #allocation6 [shape = 'u8[65536]{0}', space=vmem, size = 0x10000, scoped, tag = 'input window, operand 1, single buffered']
    #allocation7 [shape = 's32[1]{0}', space=sflag, size = 0x4, scoped, tag = 'scoped memory for tpu_custom_call.1']
    #allocation8 [shape = 'u8[65536]{0}', space=vmem, size = 0x10000, scoped, tag = 'input window, operand 3, single buffered']
    #allocation9 [shape = 'u8[8192]{0}', space=vmem, size = 0x2000, scoped, tag = 'output window, operand 0']
    %10 = vsyncpa [#allocation4], 0
    %s11 = scalar_lea.sflag [#allocation4], 1
    %12 = vsyncpa %s11, 0
    %13 = vsyncpa [#allocation7], 0
    %14 = vsyncpa [#allocation5], 0
    %s15 = scalar_lea.sflag [#allocation5], 1
    %16 = vsyncpa %s15, 0
    loop: start=0, step=1, limit=4
    $region2: #{tpu_custom_call.1} parent=1 // loop_pre_header
      _
    $region3: #{tpu_custom_call.1} parent=1 // loop_header
      %s18 = sphi 0, %s22
      %p19 = scmp.ge.s32.totalorder %s18, 4
      %s28 = sphi 0, %s30
      %s31 = sphi 0, %s28
      %s32 = sphi 0, %s31
      %s48 = sphi 0, %s32
      %s52 = sphi 0, %s52
      %s54 = sphi 0, %s52
      %s55 = sphi 0, %s54
      %s69 = sphi 0, %s55
      %s73 = sphi 0, %s73
      %s75 = sphi 0, %s73
      %s76 = sphi 0, %s75
      %s90 = sphi 0, %s76
      %s94 = sphi 0, %s94
      %s96 = sphi 0, %s94
      %s97 = sphi 0, %s96
      %s111 = sphi 0, %s97
      %s115 = sphi 0, %s115
      %s117 = sphi 0, %s115
      %s118 = sphi 0, %s117
      %s132 = sphi 0, %s118
      %s138 = sphi 0, %s140
      %s141 = sphi 0, %s138
      %s142 = sphi 0, %s141
      %s158 = sphi 0, %s142
    $region4: #{tpu_custom_call.1} parent=1 // loop_header_branch
      %21 = sbr.rel (%p19) target = $region8
    $region5: #{tpu_custom_call.1} parent=1 // loop_body
      %s23 = ssub.s32 %s18, 1
      %s24 = ssub.s32 %s18, 2
      %s25 = sadd.s32 %s18, 1
      %s26 = ssub.s32 %s18, %s25
      %p27 = scmp.eq.s32.totalorder %s26, 0
      %s29 = sadd.s32 %s28, 1
      %s30 = scalar_select %p27, %s28, %s29
      %p33 = pneg %p27
      %p34 = scmp.eq.s32.totalorder %s18, 1
      %p35 = por %p33, %p34
      %p36 = scmp.ne.s32.totalorder %s28, %s31
      %p37 = scmp.eq.s32.totalorder %s18, 0
      %p38 = por %p36, %p37
      %p39 = scmp.ne.s32.totalorder %s28, %s31
      %p40 = scmp.eq.s32.totalorder %s23, 1
      %p41 = por %p39, %p40
      %p42 = scmp.ne.s32.totalorder %s31, %s32
      %p43 = scmp.eq.s32.totalorder %s23, 0
      %p44 = por %p42, %p43
      %p45 = scmp.ne.s32.totalorder %s31, %s32
      %p46 = scmp.eq.s32.totalorder %s24, 1
      %p47 = por %p45, %p46
      %p49 = scmp.ne.s32.totalorder %s32, %s48
      %p50 = scmp.eq.s32.totalorder %s24, 0
      %p51 = por %p49, %p50
      %s53 = sadd.s32 %s52, 1
      %p56 = scmp.eq.s32.totalorder %s18, 1
      %p57 = scmp.ne.s32.totalorder %s52, %s54
      %p58 = scmp.eq.s32.totalorder %s18, 0
      %p59 = por %p57, %p58
      %p60 = scmp.ne.s32.totalorder %s52, %s54
      %p61 = scmp.eq.s32.totalorder %s23, 1
      %p62 = por %p60, %p61
      %p63 = scmp.ne.s32.totalorder %s54, %s55
      %p64 = scmp.eq.s32.totalorder %s23, 0
      %p65 = por %p63, %p64
      %p66 = scmp.ne.s32.totalorder %s54, %s55
      %p67 = scmp.eq.s32.totalorder %s24, 1
      %p68 = por %p66, %p67
      %p70 = scmp.ne.s32.totalorder %s55, %s69
      %p71 = scmp.eq.s32.totalorder %s24, 0
      %p72 = por %p70, %p71
      %s74 = sadd.s32 %s73, 1
      %p77 = scmp.eq.s32.totalorder %s18, 1
      %p78 = scmp.ne.s32.totalorder %s73, %s75
      %p79 = scmp.eq.s32.totalorder %s18, 0
      %p80 = por %p78, %p79
      %p81 = scmp.ne.s32.totalorder %s73, %s75
      %p82 = scmp.eq.s32.totalorder %s23, 1
      %p83 = por %p81, %p82
      %p84 = scmp.ne.s32.totalorder %s75, %s76
      %p85 = scmp.eq.s32.totalorder %s23, 0
      %p86 = por %p84, %p85
      %p87 = scmp.ne.s32.totalorder %s75, %s76
      %p88 = scmp.eq.s32.totalorder %s24, 1
      %p89 = por %p87, %p88
      %p91 = scmp.ne.s32.totalorder %s76, %s90
      %p92 = scmp.eq.s32.totalorder %s24, 0
      %p93 = por %p91, %p92
      %s95 = sadd.s32 %s94, 1
      %p98 = scmp.eq.s32.totalorder %s18, 1
      %p99 = scmp.ne.s32.totalorder %s94, %s96
      %p100 = scmp.eq.s32.totalorder %s18, 0
      %p101 = por %p99, %p100
      %p102 = scmp.ne.s32.totalorder %s94, %s96
      %p103 = scmp.eq.s32.totalorder %s23, 1
      %p104 = por %p102, %p103
      %p105 = scmp.ne.s32.totalorder %s96, %s97
      %p106 = scmp.eq.s32.totalorder %s23, 0
      %p107 = por %p105, %p106
      %p108 = scmp.ne.s32.totalorder %s96, %s97
      %p109 = scmp.eq.s32.totalorder %s24, 1
      %p110 = por %p108, %p109
      %p112 = scmp.ne.s32.totalorder %s97, %s111
      %p113 = scmp.eq.s32.totalorder %s24, 0
      %p114 = por %p112, %p113
      %s116 = sadd.s32 %s115, 1
      %p119 = scmp.eq.s32.totalorder %s18, 1
      %p120 = scmp.ne.s32.totalorder %s115, %s117
      %p121 = scmp.eq.s32.totalorder %s18, 0
      %p122 = por %p120, %p121
      %p123 = scmp.ne.s32.totalorder %s115, %s117
      %p124 = scmp.eq.s32.totalorder %s23, 1
      %p125 = por %p123, %p124
      %p126 = scmp.ne.s32.totalorder %s117, %s118
      %p127 = scmp.eq.s32.totalorder %s23, 0
      %p128 = por %p126, %p127
      %p129 = scmp.ne.s32.totalorder %s117, %s118
      %p130 = scmp.eq.s32.totalorder %s24, 1
      %p131 = por %p129, %p130
      %p133 = scmp.ne.s32.totalorder %s118, %s132
      %p134 = scmp.eq.s32.totalorder %s24, 0
      %p135 = por %p133, %p134
      %s136 = ssub.s32 %s18, %s25
      %p137 = scmp.eq.s32.totalorder %s136, 0
      %s139 = sadd.s32 %s138, 1
      %s140 = scalar_select %p137, %s138, %s139
      %p143 = pneg %p137
      %p144 = scmp.eq.s32.totalorder %s18, 1
      %p145 = por %p143, %p144
      %p146 = scmp.ne.s32.totalorder %s138, %s141
      %p147 = scmp.eq.s32.totalorder %s18, 0
      %p148 = por %p146, %p147
      %p149 = scmp.ne.s32.totalorder %s138, %s141
      %p150 = scmp.eq.s32.totalorder %s23, 1
      %p151 = por %p149, %p150
      %p152 = scmp.ne.s32.totalorder %s141, %s142
      %p153 = scmp.eq.s32.totalorder %s23, 0
      %p154 = por %p152, %p153
      %p155 = scmp.ne.s32.totalorder %s141, %s142
      %p156 = scmp.eq.s32.totalorder %s24, 1
      %p157 = por %p155, %p156
      %p159 = scmp.ne.s32.totalorder %s142, %s158
      %p160 = scmp.eq.s32.totalorder %s24, 0
      %p161 = por %p159, %p160
      %p162 = scmp.le.s32.totalorder 1, %s18
      %p163 = scmp.lt.s32.totalorder %s18, 3
      %p164 = pnand %p162, %p163
      %p165 = pneg %p164
      // Predicated region
      $region9: #{tpu_custom_call.1} parent=5 // pred_check
        _
      $region10: #{tpu_custom_call.1} parent=5 // pred_check_branch
        %167 = sbr.rel (%p164) target = $region12
      $region11: #{tpu_custom_call.1} parent=5 // pred_region
        %s168 = ssub.s32 %s18, 1
        // Predicated region
        $region13: #{tpu_custom_call.1} parent=11 // pred_check
          %p169 = pneg %p65
        $region14: #{tpu_custom_call.1} parent=11 // pred_check_branch
          %171 = sbr.rel (%p169) target = $region16
        $region15: #{tpu_custom_call.1} parent=11 // pred_region
          %s173 = ssub.s32 2048, 2048
          %174 = vsyncadd [#allocation7], %s173
          %s175 = sshll.u32 [#allocation6], 4
          %s176 = int_to_ptr.vmem [resolvable:$true] %s175
          %181 = dma.hbm_to_vmem [thread:$0]  %s1, 2048, %s176, [#allocation7], 128, 128, 8
        $region16: #{tpu_custom_call.1} parent=11 // pred_fallthru
          _
        // Predicated region
        $region17: #{tpu_custom_call.1} parent=11 // pred_check
          %p182 = pneg %p86
        $region18: #{tpu_custom_call.1} parent=11 // pred_check_branch
          %184 = sbr.rel (%p182) target = $region20
        $region19: #{tpu_custom_call.1} parent=11 // pred_region
          _
        $region20: #{tpu_custom_call.1} parent=11 // pred_fallthru
          _
        // Predicated region
        $region21: #{tpu_custom_call.1} parent=11 // pred_check
          %p185 = pneg %p107
        $region22: #{tpu_custom_call.1} parent=11 // pred_check_branch
          %187 = sbr.rel (%p185) target = $region24
        $region23: #{tpu_custom_call.1} parent=11 // pred_region
          %s189 = ssub.s32 2048, 2048
          %190 = vsyncadd [#allocation7], %s189
          %s191 = sshll.u32 [#allocation8], 4
          %s192 = int_to_ptr.vmem [resolvable:$true] %s191
          %197 = dma.hbm_to_vmem [thread:$0]  %s3, 2048, %s192, [#allocation7], 128, 128, 8
        $region24: #{tpu_custom_call.1} parent=11 // pred_fallthru
          _
        // Predicated region
        $region25: #{tpu_custom_call.1} parent=11 // pred_check
          %p198 = pneg %p128
        $region26: #{tpu_custom_call.1} parent=11 // pred_check_branch
          %200 = sbr.rel (%p198) target = $region28
        $region27: #{tpu_custom_call.1} parent=11 // pred_region
          _
        $region28: #{tpu_custom_call.1} parent=11 // pred_fallthru
          _
      $region12: #{tpu_custom_call.1} parent=5 // pred_fallthru
        _
      %p201 = scmp.lt.s32.totalorder %s18, 2
      // Predicated region
      $region29: #{tpu_custom_call.1} parent=5 // pred_check
        %p202 = pneg %p201
      $region30: #{tpu_custom_call.1} parent=5 // pred_check_branch
        %204 = sbr.rel (%p202) target = $region32
      $region31: #{tpu_custom_call.1} parent=5 // pred_region
        // Predicated region
        $region33: #{tpu_custom_call.1} parent=31 // pred_check
          %p205 = pneg %p38
        $region34: #{tpu_custom_call.1} parent=31 // pred_check_branch
          %207 = sbr.rel (%p205) target = $region36
        $region35: #{tpu_custom_call.1} parent=31 // pred_region
          %s208 = sand.u32 %s28, 1
          %s209 = scalar_lea.sflag [#allocation4], %s208
          %s210 = sand.u32 %s28, 1
          %s211 = smul.addr %s210, 8
          %s212 = scalar_lea.vmem [#allocation3], %s211
          %s214 = ssub.s32 128, 128
          %215 = vsyncadd %s209, %s214
          %s216 = smul.addr %s18, 128
          %s217 = scalar_lea.hbm %s0, %s216
          %s219 = sshll.u32 %s212, 4
          %s220 = int_to_ptr.vmem [resolvable:$true] %s219
          %222 = dma.hbm_to_vmem [thread:$0]  %s217, 128, %s220, %s209
        $region36: #{tpu_custom_call.1} parent=31 // pred_fallthru
          _
      $region32: #{tpu_custom_call.1} parent=5 // pred_fallthru
        _
      %p223 = scmp.le.s32.totalorder 1, %s18
      %p224 = scmp.lt.s32.totalorder %s18, 3
      %p225 = pnand %p223, %p224
      %p226 = pneg %p225
      // Predicated region
      $region37: #{tpu_custom_call.1} parent=5 // pred_check
        _
      $region38: #{tpu_custom_call.1} parent=5 // pred_check_branch
        %228 = sbr.rel (%p225) target = $region40
      $region39: #{tpu_custom_call.1} parent=5 // pred_region
        %s229 = ssub.s32 %s18, 1
        %s230 = sand.u32 %s31, 1
        %s231 = scalar_lea.sflag [#allocation4], %s230
        %s232 = sand.u32 %s31, 1
        %s233 = smul.addr %s232, 8
        %s234 = scalar_lea.vmem [#allocation3], %s233
        // Predicated region
        $region41: #{tpu_custom_call.1} parent=39 // pred_check
          %p235 = pneg %p44
        $region42: #{tpu_custom_call.1} parent=39 // pred_check_branch
          %237 = sbr.rel (%p235) target = $region44
        $region43: #{tpu_custom_call.1} parent=39 // pred_region
          %238 = dma.done %s231, 128
        $region44: #{tpu_custom_call.1} parent=39 // pred_fallthru
          _
        // Predicated region
        $region45: #{tpu_custom_call.1} parent=39 // pred_check
          %p239 = pneg %p65
        $region46: #{tpu_custom_call.1} parent=39 // pred_check_branch
          %241 = sbr.rel (%p239) target = $region48
        $region47: #{tpu_custom_call.1} parent=39 // pred_region
          %242 = dma.done [#allocation7], 2048
        $region48: #{tpu_custom_call.1} parent=39 // pred_fallthru
          _
        // Predicated region
        $region49: #{tpu_custom_call.1} parent=39 // pred_check
          %p243 = pneg %p107
        $region50: #{tpu_custom_call.1} parent=39 // pred_check_branch
          %245 = sbr.rel (%p243) target = $region52
        $region51: #{tpu_custom_call.1} parent=39 // pred_region
          %246 = dma.done [#allocation7], 2048
        $region52: #{tpu_custom_call.1} parent=39 // pred_fallthru
          _
        %s247 = sand.u32 %s31, 1
        %s248 = scalar_lea.sflag [#allocation4], %s247
        %s249 = sand.u32 %s31, 1
        %s250 = smul.addr %s249, 8
        %s251 = scalar_lea.vmem [#allocation3], %s250
        %p252 = pneg %p44
        %p253 = pneg %p41
        %p254 = pneg %p65
        %p255 = pneg %p62
        %p256 = pneg %p86
        %p257 = pneg %p83
        %p258 = pneg %p107
        %p259 = pneg %p104
        %p260 = pneg %p128
        %p261 = pneg %p125
        %p262 = pneg %p154
        %p263 = pneg %p151
        %s264 = sand.u32 %s141, 1
        %s265 = scalar_lea.sflag [#allocation5], %s264
        %s266 = sand.u32 %s141, 1
        %s267 = smul.addr %s266, 8
        %s268 = scalar_lea.vmem [#allocation9], %s267
        %269 = vst [vmem:[#allocation2] sm:$0xff] 0.0
        %v270 = vld [vmem:[%s234] sm:$0xff]
        %v271 = vld [vmem:[#allocation6] sm:$0xff]
        %v272 = vld [vmem:[#allocation6 + $0x8] sm:$0xff]
        %v273 = vld [vmem:[#allocation6 + $0x10] sm:$0xff]
        %v274 = vld [vmem:[#allocation6 + $0x18] sm:$0xff]
        %v275 = vld [vmem:[#allocation6 + $0x20] sm:$0xff]
        %v276 = vld [vmem:[#allocation6 + $0x28] sm:$0xff]
        %v277 = vld [vmem:[#allocation6 + $0x30] sm:$0xff]
        %v278 = vld [vmem:[#allocation6 + $0x38] sm:$0xff]
        %v279 = vld [vmem:[#allocation6 + $0x40] sm:$0xff]
        %v280 = vld [vmem:[#allocation6 + $0x48] sm:$0xff]
        %v281 = vld [vmem:[#allocation6 + $0x50] sm:$0xff]
        %v282 = vld [vmem:[#allocation6 + $0x58] sm:$0xff]
        %v283 = vld [vmem:[#allocation6 + $0x60] sm:$0xff]
        %v284 = vld [vmem:[#allocation6 + $0x68] sm:$0xff]
        %v285 = vld [vmem:[#allocation6 + $0x70] sm:$0xff]
        %v286 = vld [vmem:[#allocation6 + $0x78] sm:$0xff]
        %v287 = vld [vmem:[%s2] sm:$0x1]
        %v289 = vlaneseq
        %v290 = vshrl.u32 %v289, 7
        %v291 = vsub.s32 0, %v290
        %v292 = vrot.slane %v287, %v291
        %294 = vmatprep.subr.mxu0 0.0
        %295 = vmatpush1.msra.mxu0 %v271
        %296 = vmatprep.subr.mxu0 0.0
        %297 = vmatpush1.msra.mxu0 %v272
        %298 = vmatprep.subr.mxu0 0.0
        %299 = vmatpush1.msra.mxu0 %v273
        %300 = vmatprep.subr.mxu0 0.0
        %301 = vmatpush1.msra.mxu0 %v274
        %302 = vmatprep.subr.mxu0 0.0
        %303 = vmatpush1.msra.mxu0 %v275
        %304 = vmatprep.subr.mxu0 0.0
        %305 = vmatpush1.msra.mxu0 %v276
        %306 = vmatprep.subr.mxu0 0.0
        %307 = vmatpush1.msra.mxu0 %v277
        %308 = vmatprep.subr.mxu0 0.0
        %309 = vmatpush1.msra.mxu0 %v278
        %310 = vmatprep.subr.mxu0 0.0
        %311 = vmatpush1.msra.mxu0 %v279
        %312 = vmatprep.subr.mxu0 0.0
        %313 = vmatpush1.msra.mxu0 %v280
        %314 = vmatprep.subr.mxu0 0.0
        %315 = vmatpush1.msra.mxu0 %v281
        %316 = vmatprep.subr.mxu0 0.0
        %317 = vmatpush1.msra.mxu0 %v282
        %318 = vmatprep.subr.mxu0 0.0
        %319 = vmatpush1.msra.mxu0 %v283
        %320 = vmatprep.subr.mxu0 0.0
        %321 = vmatpush1.msra.mxu0 %v284
        %322 = vmatprep.subr.mxu0 0.0
        %323 = vmatpush1.msra.mxu0 %v285
        %324 = vmatprep.subr.mxu0 0.0
        %325 = vmatpush1.msra.mxu0 %v286
        %326 = vmatprep.subr.mxu0 0.0
        %327 = vmatpush1.msra.mxu0 0.0
        %328 = vmatprep.subr.mxu0 0.0
        %329 = vmatpush1.msra.mxu0 0.0
        %330 = vmatprep.subr.mxu0 0.0
        %331 = vmatpush1.msra.mxu0 0.0
        %332 = vmatprep.subr.mxu0 0.0
        %333 = vmatpush1.msra.mxu0 0.0
        %334 = vmatprep.subr.mxu0 0.0
        %335 = vmatpush1.msra.mxu0 0.0
        %336 = vmatprep.subr.mxu0 0.0
        %337 = vmatpush1.msra.mxu0 0.0
        %338 = vmatprep.subr.mxu0 0.0
        %339 = vmatpush1.msra.mxu0 0.0
        %340 = vmatprep.subr.mxu0 0.0
        %341 = vmatpush1.msra.mxu0 0.0
        %342 = vmatprep.subr.mxu0 0.0
        %343 = vmatpush1.msra.mxu0 0.0
        %344 = vmatprep.subr.mxu0 0.0
        %345 = vmatpush1.msra.mxu0 0.0
        %346 = vmatprep.subr.mxu0 0.0
        %347 = vmatpush1.msra.mxu0 0.0
        %348 = vmatprep.subr.mxu0 0.0
        %349 = vmatpush1.msra.mxu0 0.0
        %350 = vmatprep.subr.mxu0 0.0
        %351 = vmatpush1.msra.mxu0 0.0
        %352 = vmatprep.subr.mxu0 0.0
        %353 = vmatpush1.msra.mxu0 0.0
        %354 = vmatprep.subr.mxu0 0.0
        %355 = vmatpush1.msra.mxu0 0.0
        %356 = vmatprep.subr.mxu0 0.0
        %357 = vmatpush1.msra.mxu0 0.0
        %358 = vmatprep.mubr.f32.mxu0 0.0
        %359 = vmatmul.mubr.f32.gmra.mrb[0].mxu0 %v270
        %v360 = vpop.f32.mrb[0].mxu0
        %v361 = vadd.f32 %v292, %v360
        %v362 = vpop.f32.mrb[0].mxu0
        %363 = vdwg.mxu0
        %v364 = vmul.f32 %v361, 0.5
        %v365 = vmul.f32 %v361, 0.70710677
        %v366 = verf.f32.pop %v365
        %v367 = vadd.f32 %v366, 1.0
        %v368 = vmul.f32 %v364, %v367
        %v369 = vld [vmem:[#allocation2] sm:$0xff]
        %v370 = vld [vmem:[#allocation8] sm:$0xff]
        %v371 = vld [vmem:[#allocation8 + $0x8] sm:$0xff]
        %v372 = vld [vmem:[#allocation8 + $0x10] sm:$0xff]
        %v373 = vld [vmem:[#allocation8 + $0x18] sm:$0xff]
        %v374 = vld [vmem:[#allocation8 + $0x20] sm:$0xff]
        %v375 = vld [vmem:[#allocation8 + $0x28] sm:$0xff]
        %v376 = vld [vmem:[#allocation8 + $0x30] sm:$0xff]
        %v377 = vld [vmem:[#allocation8 + $0x38] sm:$0xff]
        %v378 = vld [vmem:[#allocation8 + $0x40] sm:$0xff]
        %v379 = vld [vmem:[#allocation8 + $0x48] sm:$0xff]
        %v380 = vld [vmem:[#allocation8 + $0x50] sm:$0xff]
        %v381 = vld [vmem:[#allocation8 + $0x58] sm:$0xff]
        %v382 = vld [vmem:[#allocation8 + $0x60] sm:$0xff]
        %v383 = vld [vmem:[#allocation8 + $0x68] sm:$0xff]
        %v384 = vld [vmem:[#allocation8 + $0x70] sm:$0xff]
        %v385 = vld [vmem:[#allocation8 + $0x78] sm:$0xff]
        %386 = vmatprep.subr.mxu0 0.0
        %387 = vmatpush1.msra.mxu0 %v370
        %388 = vmatprep.subr.mxu0 0.0
        %389 = vmatpush1.msra.mxu0 %v371
        %390 = vmatprep.subr.mxu0 0.0
        %391 = vmatpush1.msra.mxu0 %v372
        %392 = vmatprep.subr.mxu0 0.0
        %393 = vmatpush1.msra.mxu0 %v373
        %394 = vmatprep.subr.mxu0 0.0
        %395 = vmatpush1.msra.mxu0 %v374
        %396 = vmatprep.subr.mxu0 0.0
        %397 = vmatpush1.msra.mxu0 %v375
        %398 = vmatprep.subr.mxu0 0.0
        %399 = vmatpush1.msra.mxu0 %v376
        %400 = vmatprep.subr.mxu0 0.0
        %401 = vmatpush1.msra.mxu0 %v377
        %402 = vmatprep.subr.mxu0 0.0
        %403 = vmatpush1.msra.mxu0 %v378
        %404 = vmatprep.subr.mxu0 0.0
        %405 = vmatpush1.msra.mxu0 %v379
        %406 = vmatprep.subr.mxu0 0.0
        %407 = vmatpush1.msra.mxu0 %v380
        %408 = vmatprep.subr.mxu0 0.0
        %409 = vmatpush1.msra.mxu0 %v381
        %410 = vmatprep.subr.mxu0 0.0
        %411 = vmatpush1.msra.mxu0 %v382
        %412 = vmatprep.subr.mxu0 0.0
        %413 = vmatpush1.msra.mxu0 %v383
        %414 = vmatprep.subr.mxu0 0.0
        %415 = vmatpush1.msra.mxu0 %v384
        %416 = vmatprep.subr.mxu0 0.0
        %417 = vmatpush1.msra.mxu0 %v385
        %418 = vmatprep.subr.mxu0 0.0
        %419 = vmatpush1.msra.mxu0 0.0
        %420 = vmatprep.subr.mxu0 0.0
        %421 = vmatpush1.msra.mxu0 0.0
        %422 = vmatprep.subr.mxu0 0.0
        %423 = vmatpush1.msra.mxu0 0.0
        %424 = vmatprep.subr.mxu0 0.0
        %425 = vmatpush1.msra.mxu0 0.0
        %426 = vmatprep.subr.mxu0 0.0
        %427 = vmatpush1.msra.mxu0 0.0
        %428 = vmatprep.subr.mxu0 0.0
        %429 = vmatpush1.msra.mxu0 0.0
        %430 = vmatprep.subr.mxu0 0.0
        %431 = vmatpush1.msra.mxu0 0.0
        %432 = vmatprep.subr.mxu0 0.0
        %433 = vmatpush1.msra.mxu0 0.0
        %434 = vmatprep.subr.mxu0 0.0
        %435 = vmatpush1.msra.mxu0 0.0
        %436 = vmatprep.subr.mxu0 0.0
        %437 = vmatpush1.msra.mxu0 0.0
        %438 = vmatprep.subr.mxu0 0.0
        %439 = vmatpush1.msra.mxu0 0.0
        %440 = vmatprep.subr.mxu0 0.0
        %441 = vmatpush1.msra.mxu0 0.0
        %442 = vmatprep.subr.mxu0 0.0
        %443 = vmatpush1.msra.mxu0 0.0
        %444 = vmatprep.subr.mxu0 0.0
        %445 = vmatpush1.msra.mxu0 0.0
        %446 = vmatprep.subr.mxu0 0.0
        %447 = vmatpush1.msra.mxu0 0.0
        %448 = vmatprep.subr.mxu0 0.0
        %449 = vmatpush1.msra.mxu0 0.0
        %450 = vmatprep.mubr.f32.mxu0 0.0
        %451 = vmatmul.mubr.f32.gmra.mrb[0].mxu0 %v368
        %v452 = vpop.f32.mrb[0].mxu0
        %v453 = vadd.f32 0.0, %v452
        %v454 = vpop.f32.mrb[0].mxu0
        %455 = vdwg.mxu0
        %v456 = vadd.f32 %v369, %v453
        %457 = vst [vmem:[#allocation2] sm:$0xff] %v456
        %v458 = vld [vmem:[#allocation2] sm:$0xff]
        %v459 = vld [vmem:[%s4] sm:$0x1]
        %v461 = vlaneseq
        %v462 = vshrl.u32 %v461, 7
        %v463 = vsub.s32 0, %v462
        %v464 = vrot.slane %v459, %v463
        %v466 = vadd.f32 %v458, %v464
        %467 = vst [vmem:[%s268] sm:$0xff] %v466
        %s468 = sand.u32 %s141, 1
        %s469 = scalar_lea.sflag [#allocation5], %s468
        %s470 = sand.u32 %s141, 1
        %s471 = smul.addr %s470, 8
        %s472 = scalar_lea.vmem [#allocation9], %s471
        // Predicated region
        $region53: #{tpu_custom_call.1} parent=39 // pred_check
          %p473 = pneg %p151
        $region54: #{tpu_custom_call.1} parent=39 // pred_check_branch
          %475 = sbr.rel (%p473) target = $region56
        $region55: #{tpu_custom_call.1} parent=39 // pred_region
          %s477 = ssub.s32 128, 128
          %478 = vsyncadd %s469, %s477
          %s479 = smul.addr %s23, 128
          %s480 = scalar_lea.hbm %s5, %s479
          %s482 = sshll.u32 %s472, 4
          %s483 = int_to_ptr.vmem [resolvable:$true] %s482
          %485 = dma.vmem_to_hbm [thread:$0]  %s483, 128, %s480, %s469
        $region56: #{tpu_custom_call.1} parent=39 // pred_fallthru
          _
      $region40: #{tpu_custom_call.1} parent=5 // pred_fallthru
        _
      %p486 = scmp.le.s32.totalorder 2, %s18
      // Predicated region
      $region57: #{tpu_custom_call.1} parent=5 // pred_check
        %p487 = pneg %p486
      $region58: #{tpu_custom_call.1} parent=5 // pred_check_branch
        %489 = sbr.rel (%p487) target = $region60
      $region59: #{tpu_custom_call.1} parent=5 // pred_region
        %s490 = ssub.s32 %s18, 2
        // Predicated region
        $region61: #{tpu_custom_call.1} parent=59 // pred_check
          %p491 = pneg %p157
        $region62: #{tpu_custom_call.1} parent=59 // pred_check_branch
          %493 = sbr.rel (%p491) target = $region64
        $region63: #{tpu_custom_call.1} parent=59 // pred_region
          %s494 = sand.u32 %s142, 1
          %s495 = scalar_lea.sflag [#allocation5], %s494
          %s496 = sand.u32 %s142, 1
          %s497 = smul.addr %s496, 8
          %s498 = scalar_lea.vmem [#allocation9], %s497
          %499 = dma.done %s495, 128
        $region64: #{tpu_custom_call.1} parent=59 // pred_fallthru
          _
      $region60: #{tpu_custom_call.1} parent=5 // pred_fallthru
        _
    $region6: #{tpu_custom_call.1} parent=1 // loop_footer
      %s22 = sadd.s32 1, %s18
    $region7: #{tpu_custom_call.1} parent=1 // loop_footer_branch
      %17 = sbr.rel target = $region3
    $region8: #{tpu_custom_call.1} parent=1 // loop_exit
      _
    %500 = vsyncpa [#allocation4], 1
    %s501 = scalar_lea.sflag [#allocation4], 1
    %502 = vsyncpa %s501, 1
    %503 = vsyncpa [#allocation7], 1
    %504 = vsyncpa [#allocation5], 1
    %s505 = scalar_lea.sflag [#allocation5], 1
    %506 = vsyncpa %s505, 1

</llo_original>
